<compile_context>
chip_gen: v5e
topology: v5e:2x2
jax: 0.10.0
libtpu: 0.0.40
codegen_flags: <defaults>
</compile_context>

<pallas_src>
import jax
import jax.numpy as jnp
from jax import lax
from jax.experimental import pallas as pl
from jax.experimental.pallas import tpu as pltpu


def _mha_kernel(q_ref, k_ref, v_ref,
                wq_ref, bq_ref, wk_ref, bk_ref, wv_ref, bv_ref,
                wo_ref, bo_ref,
                out_ref, attn_ref,
                k_scratch, v_scratch):
    qt = pl.program_id(1)          # query-tile index
    h = pl.program_id(2)           # head index
    cd = wq_ref.dtype              # MXU operand dtype (f32 or bf16)

    # ---- K/V projection for head h: once per (batch, head), at first q-tile,
    #      kept in VMEM scratch across all query tiles. ----
    @pl.when(qt == 0)
    def _():
        kh = jnp.dot(k_ref[0], wk_ref[h],
                     preferred_element_type=jnp.float32) + bk_ref[h]      # (S, hd)
        vh = jnp.dot(v_ref[0], wv_ref[h],
                     preferred_element_type=jnp.float32) + bv_ref[h]      # (S, hd)
        k_scratch[h] = kh.astype(k_scratch.dtype)
        v_scratch[h] = vh.astype(v_scratch.dtype)

    # ---- Q projection for this (q-tile, head); softmax scale pre-folded. ----
    q_h = jnp.dot(q_ref[0], wq_ref[h],
                  preferred_element_type=jnp.float32) + bq_ref[h]         # (tq, hd) f32

    k_h = k_scratch[h]             # (S, hd) compute dtype
    v_h = v_scratch[h]             # (S, hd)

    # scores = Qh Kh^T, contracting over head_dim without materializing K^T.
    scores = lax.dot_general(q_h.astype(cd), k_h, (((1,), (1,)), ((), ())),
                             preferred_element_type=jnp.float32)          # (tq, S)
    # TODO(synk): optional `mask` argument of the PyTorch forward is not plumbed
    # through (forward is exercised with mask=None); it would be a jnp.where here.

    # Numerically stable softmax (f32) with a minimal set of (tq, S) temporaries;
    # the normalized result is written straight to the lane-dense attn block.
    m = jnp.max(scores, axis=-1, keepdims=True)
    p = jnp.exp(scores - m)
    denom = jnp.sum(p, axis=-1, keepdims=True)
    attn = p * pl.reciprocal(denom, approx=False)
    attn_ref[0, 0] = attn.astype(attn_ref.dtype)

    # Per-head context and its output-projection contribution.
    ctx = jnp.dot(attn.astype(cd), v_h, preferred_element_type=jnp.float32)       # (tq, hd)
    contrib = jnp.dot(ctx.astype(cd), wo_ref[h], preferred_element_type=jnp.float32)  # (tq, D)

    # Accumulate directly into the resident output block (no separate scratch).
    @pl.when(h == 0)
    def _():
        out_ref[0] = (contrib + bo_ref[...]).astype(out_ref.dtype)

    @pl.when(h != 0)
    def _():
        out_ref[0] = out_ref[0] + contrib.astype(out_ref.dtype)


def _choose_q_tile(S):
    """Largest query tile <= 256 that divides S (all candidates are multiples of 8)."""
    if S <= 256:
        return S
    for cand in (256, 128, 64, 32, 16, 8):
        if S % cand == 0:
            return cand
    return S


def _pick_vmem_limit():
    """Generation-aware VMEM budget: ~40 MiB on 64-MiB parts, ~96 MiB on 128-MiB parts."""
    try:
        cap = pltpu.get_tpu_info().vmem_capacity_bytes
    except Exception:
        return None
    if cap <= 64 * 1024 * 1024:
        return 40 * 1024 * 1024
    return 96 * 1024 * 1024


def multi_head_attention(query, key, value, params, *, num_heads,
                         q_tile=None, compute_dtype=jnp.float32,
                         attn_dtype=jnp.float32):
    """Pallas implementation of MultiHeadAttention.forward (mask=None).

    query/key/value: (B, S, D)
    params: dict with wq,bq,wk,bk,wv,bv,wo,bo  (W: (D, D) PyTorch layout, b: (D,))
    compute_dtype: MXU operand dtype (jnp.bfloat16 recommended on v6e/v7x);
                   accumulation stays f32.
    Returns (multihead_output (B, S, D), attention_weights (B, H, S, S)).
    """
    B, S, D = query.shape
    H = num_heads
    assert D % H == 0, "d_model must be divisible by num_heads"
    hd = D // H
    scale = 1.0 / jnp.sqrt(jnp.float32(hd))

    tq = q_tile if q_tile is not None else _choose_q_tile(S)
    assert S % tq == 0, "query tile must divide sequence length"
    n_qt = S // tq

    # ---- one-time HBM-side weight prep (pre-transpose + per-head split) ----
    def split_in_proj(w):                       # (D_out, D_in) -> (H, D_in, hd) of W.T
        return jnp.transpose(w.T.reshape(D, H, hd), (1, 0, 2))

    wq_h = (split_in_proj(params["wq"]) * scale).astype(compute_dtype)   # scale folded in
    wk_h = split_in_proj(params["wk"]).astype(compute_dtype)
    wv_h = split_in_proj(params["wv"]).astype(compute_dtype)
    wo_h = params["wo"].T.reshape(H, hd, D).astype(compute_dtype)        # (H, hd, D)

    bq = (params["bq"] * scale).reshape(H, 1, hd).astype(jnp.float32)
    bk = params["bk"].reshape(H, 1, hd).astype(jnp.float32)
    bv = params["bv"].reshape(H, 1, hd).astype(jnp.float32)
    bo = params["bo"].reshape(1, D).astype(jnp.float32)

    x_q = query.astype(compute_dtype)
    x_k = key.astype(compute_dtype)
    x_v = value.astype(compute_dtype)

    # ---- BlockSpecs ----
    q_spec = pl.BlockSpec((1, tq, D), lambda b, q, h: (b, q, 0))
    kv_spec = pl.BlockSpec((1, S, D), lambda b, q, h: (b, 0, 0))          # resident per batch
    w_in_spec = pl.BlockSpec((H, D, hd), lambda b, q, h: (0, 0, 0))       # resident (whole grid)
    b_in_spec = pl.BlockSpec((H, 1, hd), lambda b, q, h: (0, 0, 0))
    wo_spec = pl.BlockSpec((H, hd, D), lambda b, q, h: (0, 0, 0))
    bo_spec = pl.BlockSpec((1, D), lambda b, q, h: (0, 0))

    out_spec = pl.BlockSpec((1, tq, D), lambda b, q, h: (b, q, 0))        # resident across h
    attn_spec = pl.BlockSpec((1, 1, tq, S), lambda b, q, h: (b, h, q, 0)) # lane-dense (last dim S)

    flops = int(B * (8 * S * D * D + 4 * S * S * D))
    cost = pl.CostEstimate(
        flops=flops,
        transcendentals=int(B * H * S * S),
        bytes_accessed=int(4 * (4 * B * S * D + 4 * D * D + 4 * D)
                           + B * H * S * S * jnp.dtype(attn_dtype).itemsize),
    )

    out, attn = pl.pallas_call(
        _mha_kernel,
        out_shape=(
            jax.ShapeDtypeStruct((B, S, D), query.dtype),
            jax.ShapeDtypeStruct((B, H, S, S), attn_dtype),
        ),
        grid_spec=pltpu.PrefetchScalarGridSpec(
            num_scalar_prefetch=0,
            grid=(B, n_qt, H),
            in_specs=[
                q_spec, kv_spec, kv_spec,          # query (tiled), key, value (resident)
                w_in_spec, b_in_spec,              # query projection (per-head, resident)
                w_in_spec, b_in_spec,              # key projection
                w_in_spec, b_in_spec,              # value projection
                wo_spec, bo_spec,                  # output projection
            ],
            out_specs=[out_spec, attn_spec],
            scratch_shapes=[
                pltpu.VMEM((H, S, hd), compute_dtype),   # per-head K (filled at q-tile 0)
                pltpu.VMEM((H, S, hd), compute_dtype),   # per-head V
            ],
        ),
        compiler_params=pltpu.CompilerParams(
            dimension_semantics=("parallel", "arbitrary", "arbitrary"),
            vmem_limit_bytes=_pick_vmem_limit(),
        ),
        cost_estimate=cost,
    )(x_q, x_k, x_v,
      wq_h, bq, wk_h, bk, wv_h, bv, wo_h, bo)
    return out, attn


def _reference(query, key, value, params, *, num_heads):
    """Pure-JAX reference mirroring the PyTorch forward."""
    B, S, D = query.shape
    hd = D // num_heads

    def lin(x, w, b):
        return x @ w.T + b

    Q = lin(query, params["wq"], params["bq"])
    K = lin(key, params["wk"], params["bk"])
    V = lin(value, params["wv"], params["bv"])
    Q = Q.reshape(B, S, num_heads, hd).transpose(0, 2, 1, 3)
    K = K.reshape(B, S, num_heads, hd).transpose(0, 2, 1, 3)
    V = V.reshape(B, S, num_heads, hd).transpose(0, 2, 1, 3)
    scores = jnp.einsum('bhqd,bhkd->bhqk', Q, K) / jnp.sqrt(jnp.float32(hd))
    attn = jax.nn.softmax(scores, axis=-1)
    ctx = jnp.einsum('bhqk,bhkd->bhqd', attn, V)
    ctx = ctx.transpose(0, 2, 1, 3).reshape(B, S, D)
    out = lin(ctx, params["wo"], params["bo"])
    return out, attn


if __name__ == "__main__":
    B, S, D, H = 2, 8, 32, 4

    key0 = jax.random.PRNGKey(0)
    keys = jax.random.split(key0, 12)
    init_scale = 1.0 / jnp.sqrt(jnp.float32(D))

    params = {
        "wq": jax.random.uniform(keys[0], (D, D), jnp.float32, -init_scale, init_scale),
        "bq": jax.random.uniform(keys[1], (D,), jnp.float32, -init_scale, init_scale),
        "wk": jax.random.uniform(keys[2], (D, D), jnp.float32, -init_scale, init_scale),
        "bk": jax.random.uniform(keys[3], (D,), jnp.float32, -init_scale, init_scale),
        "wv": jax.random.uniform(keys[4], (D, D), jnp.float32, -init_scale, init_scale),
        "bv": jax.random.uniform(keys[5], (D,), jnp.float32, -init_scale, init_scale),
        "wo": jax.random.uniform(keys[6], (D, D), jnp.float32, -init_scale, init_scale),
        "bo": jax.random.uniform(keys[7], (D,), jnp.float32, -init_scale, init_scale),
    }

    query = jax.random.normal(keys[8], (B, S, D), jnp.float32)
    key_in = jax.random.normal(keys[9], (B, S, D), jnp.float32)
    value = jax.random.normal(keys[10], (B, S, D), jnp.float32)

    ref_out, ref_attn = _reference(query, key_in, value, params, num_heads=H)

    # f32 MXU-operand path: tight match against the reference.
    out, attn = multi_head_attention(query, key_in, value, params, num_heads=H)
    out = jax.block_until_ready(out)
    attn = jax.block_until_ready(attn)
    assert out.shape == (B, S, D) and attn.shape == (B, H, S, S)
    assert jnp.allclose(out, ref_out, atol=1e-4, rtol=1e-4)
    assert jnp.allclose(attn, ref_attn, atol=1e-5, rtol=1e-5)

    # bf16 MXU-operand path (the v6e/v7x perf configuration): f32 accumulation,
    # looser tolerance on the returned values as noted in the review.
    out_bf, attn_bf = multi_head_attention(query, key_in, value, params,
                                           num_heads=H, compute_dtype=jnp.bfloat16)
    out_bf = jax.block_until_ready(out_bf)
    attn_bf = jax.block_until_ready(attn_bf)
    assert jnp.all(jnp.isfinite(out_bf)) and jnp.all(jnp.isfinite(attn_bf))
    assert jnp.allclose(out_bf, ref_out, atol=5e-2, rtol=5e-2)
    assert jnp.allclose(attn_bf, ref_attn, atol=5e-2, rtol=5e-2)

    print("KERNEL_OK")
</pallas_src>

<mosaic_0001>
module attributes {stable_mosaic.version = 11 : i64} {
  func.func @_mha_kernel(%arg0: i32, %arg1: i32, %arg2: i32, %arg3: memref<1x8x32xf32, #tpu.memory_space<vmem>>, %arg4: memref<1x8x32xf32, #tpu.memory_space<vmem>>, %arg5: memref<1x8x32xf32, #tpu.memory_space<vmem>>, %arg6: memref<4x32x8xf32, #tpu.memory_space<vmem>>, %arg7: memref<4x1x8xf32, #tpu.memory_space<vmem>>, %arg8: memref<4x32x8xf32, #tpu.memory_space<vmem>>, %arg9: memref<4x1x8xf32, #tpu.memory_space<vmem>>, %arg10: memref<4x32x8xf32, #tpu.memory_space<vmem>>, %arg11: memref<4x1x8xf32, #tpu.memory_space<vmem>>, %arg12: memref<4x8x32xf32, #tpu.memory_space<vmem>>, %arg13: memref<1x32xf32, #tpu.memory_space<vmem>>, %arg14: memref<1x8x32xf32, #tpu.memory_space<vmem>>, %arg15: memref<1x1x8x8xf32, #tpu.memory_space<vmem>>, %arg16: memref<4x8x8xf32, #tpu.memory_space<vmem>>, %arg17: memref<4x8x8xf32, #tpu.memory_space<vmem>>) attributes {dimension_semantics = [#tpu.dimension_semantics<parallel>, #tpu.dimension_semantics<arbitrary>, #tpu.dimension_semantics<arbitrary>], iteration_bounds = array<i64: 2, 1, 4>, scalar_prefetch = 0 : i64, scratch_operands = 2 : i64, tpu.core_type = #tpu.core_type<tc>, window_params = [{transform_indices = @transform_0, window_bounds = array<i64: 1, 8, 32>}, {transform_indices = @transform_1, window_bounds = array<i64: 1, 8, 32>}, {transform_indices = @transform_2, window_bounds = array<i64: 1, 8, 32>}, {pipeline_mode = #tpu.pipeline_mode<synchronous>, transform_indices = @transform_3, window_bounds = array<i64: 4, 32, 8>}, {pipeline_mode = #tpu.pipeline_mode<synchronous>, transform_indices = @transform_4, window_bounds = array<i64: 4, 1, 8>}, {pipeline_mode = #tpu.pipeline_mode<synchronous>, transform_indices = @transform_5, window_bounds = array<i64: 4, 32, 8>}, {pipeline_mode = #tpu.pipeline_mode<synchronous>, transform_indices = @transform_6, window_bounds = array<i64: 4, 1, 8>}, {pipeline_mode = #tpu.pipeline_mode<synchronous>, transform_indices = @transform_7, window_bounds = array<i64: 4, 32, 8>}, {pipeline_mode = #tpu.pipeline_mode<synchronous>, transform_indices = @transform_8, window_bounds = array<i64: 4, 1, 8>}, {pipeline_mode = #tpu.pipeline_mode<synchronous>, transform_indices = @transform_9, window_bounds = array<i64: 4, 8, 32>}, {pipeline_mode = #tpu.pipeline_mode<synchronous>, transform_indices = @transform_10, window_bounds = array<i64: 1, 32>}, {transform_indices = @transform_11, window_bounds = array<i64: 1, 8, 32>}, {transform_indices = @transform_12, window_bounds = array<i64: 1, 1, 8, 8>}]} {
    %c0_i32 = arith.constant 0 : i32
    %0 = arith.cmpi eq, %arg1, %c0_i32 : i32
    %1 = arith.extui %0 : i1 to i32
    %c0_i32_0 = arith.constant 0 : i32
    %2 = arith.cmpi ne, %1, %c0_i32_0 : i32
    scf.if %2 {
      %c0_26 = arith.constant 0 : index
      %c0_27 = arith.constant 0 : index
      %c0_28 = arith.constant 0 : index
      %45 = vector.load %arg4[%c0_26, %c0_27, %c0_28] : memref<1x8x32xf32, #tpu.memory_space<vmem>>, vector<1x8x32xf32>
      %46 = vector.shape_cast %45 : vector<1x8x32xf32> to vector<8x32xf32>
      %47 = arith.index_cast %arg2 : i32 to index
      %c0_29 = arith.constant 0 : index
      %c0_30 = arith.constant 0 : index
      %48 = vector.load %arg8[%47, %c0_29, %c0_30] : memref<4x32x8xf32, #tpu.memory_space<vmem>>, vector<1x32x8xf32>
      %49 = vector.shape_cast %48 : vector<1x32x8xf32> to vector<32x8xf32>
      %cst_31 = arith.constant dense<0.000000e+00> : vector<8x8xf32>
      %50 = tpu.matmul %46, %49, %cst_31 {dimension_numbers = #tpu.dot_dimension_numbers<[1], [0], [0], [1], [0, 0, 1, 1], [], []>} : vector<8x32xf32>, vector<32x8xf32>, vector<8x8xf32> -> vector<8x8xf32>
      %51 = arith.index_cast %arg2 : i32 to index
      %c0_32 = arith.constant 0 : index
      %c0_33 = arith.constant 0 : index
      %52 = vector.load %arg9[%51, %c0_32, %c0_33] : memref<4x1x8xf32, #tpu.memory_space<vmem>>, vector<1x1x8xf32>
      %53 = vector.shape_cast %52 : vector<1x1x8xf32> to vector<1x8xf32>
      %54 = vector.broadcast %53 : vector<1x8xf32> to vector<8x8xf32>
      %55 = arith.addf %50, %54 : vector<8x8xf32>
      %c0_34 = arith.constant 0 : index
      %c0_35 = arith.constant 0 : index
      %c0_36 = arith.constant 0 : index
      %56 = vector.load %arg5[%c0_34, %c0_35, %c0_36] : memref<1x8x32xf32, #tpu.memory_space<vmem>>, vector<1x8x32xf32>
      %57 = vector.shape_cast %56 : vector<1x8x32xf32> to vector<8x32xf32>
      %58 = arith.index_cast %arg2 : i32 to index
      %c0_37 = arith.constant 0 : index
      %c0_38 = arith.constant 0 : index
      %59 = vector.load %arg10[%58, %c0_37, %c0_38] : memref<4x32x8xf32, #tpu.memory_space<vmem>>, vector<1x32x8xf32>
      %60 = vector.shape_cast %59 : vector<1x32x8xf32> to vector<32x8xf32>
      %cst_39 = arith.constant dense<0.000000e+00> : vector<8x8xf32>
      %61 = tpu.matmul %57, %60, %cst_39 {dimension_numbers = #tpu.dot_dimension_numbers<[1], [0], [0], [1], [0, 0, 1, 1], [], []>} : vector<8x32xf32>, vector<32x8xf32>, vector<8x8xf32> -> vector<8x8xf32>
      %62 = arith.index_cast %arg2 : i32 to index
      %c0_40 = arith.constant 0 : index
      %c0_41 = arith.constant 0 : index
      %63 = vector.load %arg11[%62, %c0_40, %c0_41] : memref<4x1x8xf32, #tpu.memory_space<vmem>>, vector<1x1x8xf32>
      %64 = vector.shape_cast %63 : vector<1x1x8xf32> to vector<1x8xf32>
      %65 = vector.broadcast %64 : vector<1x8xf32> to vector<8x8xf32>
      %66 = arith.addf %61, %65 : vector<8x8xf32>
      %67 = arith.index_cast %arg2 : i32 to index
      %c0_42 = arith.constant 0 : index
      %c0_43 = arith.constant 0 : index
      %68 = vector.load %arg16[%67, %c0_42, %c0_43] : memref<4x8x8xf32, #tpu.memory_space<vmem>>, vector<1x8x8xf32>
      %69 = vector.shape_cast %68 : vector<1x8x8xf32> to vector<8x8xf32>
      %70 = vector.shape_cast %55 : vector<8x8xf32> to vector<1x8x8xf32>
      tpu.vector_store %arg16[%67, %c0_42, %c0_43], %70 {strides = array<i32>} : memref<4x8x8xf32, #tpu.memory_space<vmem>>, vector<1x8x8xf32>,
      %71 = arith.index_cast %arg2 : i32 to index
      %c0_44 = arith.constant 0 : index
      %c0_45 = arith.constant 0 : index
      %72 = vector.load %arg17[%71, %c0_44, %c0_45] : memref<4x8x8xf32, #tpu.memory_space<vmem>>, vector<1x8x8xf32>
      %73 = vector.shape_cast %72 : vector<1x8x8xf32> to vector<8x8xf32>
      %74 = vector.shape_cast %66 : vector<8x8xf32> to vector<1x8x8xf32>
      tpu.vector_store %arg17[%71, %c0_44, %c0_45], %74 {strides = array<i32>} : memref<4x8x8xf32, #tpu.memory_space<vmem>>, vector<1x8x8xf32>,
    } else {
    }
    %c0 = arith.constant 0 : index
    %c0_1 = arith.constant 0 : index
    %c0_2 = arith.constant 0 : index
    %3 = vector.load %arg3[%c0, %c0_1, %c0_2] : memref<1x8x32xf32, #tpu.memory_space<vmem>>, vector<1x8x32xf32>
    %4 = vector.shape_cast %3 : vector<1x8x32xf32> to vector<8x32xf32>
    %5 = arith.index_cast %arg2 : i32 to index
    %c0_3 = arith.constant 0 : index
    %c0_4 = arith.constant 0 : index
    %6 = vector.load %arg6[%5, %c0_3, %c0_4] : memref<4x32x8xf32, #tpu.memory_space<vmem>>, vector<1x32x8xf32>
    %7 = vector.shape_cast %6 : vector<1x32x8xf32> to vector<32x8xf32>
    %cst = arith.constant dense<0.000000e+00> : vector<8x8xf32>
    %8 = tpu.matmul %4, %7, %cst {dimension_numbers = #tpu.dot_dimension_numbers<[1], [0], [0], [1], [0, 0, 1, 1], [], []>} : vector<8x32xf32>, vector<32x8xf32>, vector<8x8xf32> -> vector<8x8xf32>
    %9 = arith.index_cast %arg2 : i32 to index
    %c0_5 = arith.constant 0 : index
    %c0_6 = arith.constant 0 : index
    %10 = vector.load %arg7[%9, %c0_5, %c0_6] : memref<4x1x8xf32, #tpu.memory_space<vmem>>, vector<1x1x8xf32>
    %11 = vector.shape_cast %10 : vector<1x1x8xf32> to vector<1x8xf32>
    %12 = vector.broadcast %11 : vector<1x8xf32> to vector<8x8xf32>
    %13 = arith.addf %8, %12 : vector<8x8xf32>
    %14 = arith.index_cast %arg2 : i32 to index
    %c0_7 = arith.constant 0 : index
    %c0_8 = arith.constant 0 : index
    %15 = vector.load %arg16[%14, %c0_7, %c0_8] : memref<4x8x8xf32, #tpu.memory_space<vmem>>, vector<1x8x8xf32>
    %16 = vector.shape_cast %15 : vector<1x8x8xf32> to vector<8x8xf32>
    %17 = arith.index_cast %arg2 : i32 to index
    %c0_9 = arith.constant 0 : index
    %c0_10 = arith.constant 0 : index
    %18 = vector.load %arg17[%17, %c0_9, %c0_10] : memref<4x8x8xf32, #tpu.memory_space<vmem>>, vector<1x8x8xf32>
    %19 = vector.shape_cast %18 : vector<1x8x8xf32> to vector<8x8xf32>
    %cst_11 = arith.constant dense<0.000000e+00> : vector<8x8xf32>
    %20 = tpu.matmul %13, %16, %cst_11 {dimension_numbers = #tpu.dot_dimension_numbers<[1], [1], [0], [0], [0, 0, 1, 0], [], []>} : vector<8x8xf32>, vector<8x8xf32>, vector<8x8xf32> -> vector<8x8xf32>
    %cst_12 = arith.constant dense<0xFF800000> : vector<8xf32>
    %21 = vector.multi_reduction <maximumf>, %20, %cst_12 [1] : vector<8x8xf32> to vector<8xf32>
    %22 = vector.shape_cast %21 : vector<8xf32> to vector<8x1xf32>
    %23 = vector.broadcast %22 : vector<8x1xf32> to vector<8x8xf32>
    %24 = arith.subf %20, %23 : vector<8x8xf32>
    %25 = math.exp %24 : vector<8x8xf32>
    %cst_13 = arith.constant dense<0.000000e+00> : vector<8xf32>
    %26 = vector.multi_reduction <add>, %25, %cst_13 [1] : vector<8x8xf32> to vector<8xf32>
    %27 = vector.shape_cast %26 : vector<8xf32> to vector<8x1xf32>
    %28 = tpu.reciprocal %27 : vector<8x1xf32> -> vector<8x1xf32>
    %29 = vector.broadcast %28 : vector<8x1xf32> to vector<8x8xf32>
    %30 = arith.mulf %25, %29 : vector<8x8xf32>
    %c0_14 = arith.constant 0 : index
    %c0_15 = arith.constant 0 : index
    %c0_16 = arith.constant 0 : index
    %c0_17 = arith.constant 0 : index
    %31 = vector.load %arg15[%c0_14, %c0_15, %c0_16, %c0_17] : memref<1x1x8x8xf32, #tpu.memory_space<vmem>>, vector<1x1x8x8xf32>
    %32 = vector.shape_cast %31 : vector<1x1x8x8xf32> to vector<8x8xf32>
    %33 = vector.shape_cast %30 : vector<8x8xf32> to vector<1x1x8x8xf32>
    tpu.vector_store %arg15[%c0_14, %c0_15, %c0_16, %c0_17], %33 {strides = array<i32>} : memref<1x1x8x8xf32, #tpu.memory_space<vmem>>, vector<1x1x8x8xf32>,
    %cst_18 = arith.constant dense<0.000000e+00> : vector<8x8xf32>
    %34 = tpu.matmul %30, %19, %cst_18 {dimension_numbers = #tpu.dot_dimension_numbers<[1], [0], [0], [1], [0, 0, 1, 1], [], []>} : vector<8x8xf32>, vector<8x8xf32>, vector<8x8xf32> -> vector<8x8xf32>
    %35 = arith.index_cast %arg2 : i32 to index
    %c0_19 = arith.constant 0 : index
    %c0_20 = arith.constant 0 : index
    %36 = vector.load %arg12[%35, %c0_19, %c0_20] : memref<4x8x32xf32, #tpu.memory_space<vmem>>, vector<1x8x32xf32>
    %37 = vector.shape_cast %36 : vector<1x8x32xf32> to vector<8x32xf32>
    %cst_21 = arith.constant dense<0.000000e+00> : vector<8x32xf32>
    %38 = tpu.matmul %34, %37, %cst_21 {dimension_numbers = #tpu.dot_dimension_numbers<[1], [0], [0], [1], [0, 0, 1, 1], [], []>} : vector<8x8xf32>, vector<8x32xf32>, vector<8x32xf32> -> vector<8x32xf32>
    %c0_i32_22 = arith.constant 0 : i32
    %39 = arith.cmpi eq, %arg2, %c0_i32_22 : i32
    %40 = arith.extui %39 : i1 to i32
    %c0_i32_23 = arith.constant 0 : i32
    %41 = arith.cmpi ne, %40, %c0_i32_23 : i32
    scf.if %41 {
      %c0_26 = arith.constant 0 : index
      %c0_27 = arith.constant 0 : index
      %45 = vector.load %arg13[%c0_26, %c0_27] : memref<1x32xf32, #tpu.memory_space<vmem>>, vector<1x32xf32>
      %46 = vector.broadcast %45 : vector<1x32xf32> to vector<8x32xf32>
      %47 = arith.addf %38, %46 : vector<8x32xf32>
      %c0_28 = arith.constant 0 : index
      %c0_29 = arith.constant 0 : index
      %c0_30 = arith.constant 0 : index
      %48 = vector.load %arg14[%c0_28, %c0_29, %c0_30] : memref<1x8x32xf32, #tpu.memory_space<vmem>>, vector<1x8x32xf32>
      %49 = vector.shape_cast %48 : vector<1x8x32xf32> to vector<8x32xf32>
      %50 = vector.shape_cast %47 : vector<8x32xf32> to vector<1x8x32xf32>
      tpu.vector_store %arg14[%c0_28, %c0_29, %c0_30], %50 {strides = array<i32>} : memref<1x8x32xf32, #tpu.memory_space<vmem>>, vector<1x8x32xf32>,
    } else {
    }
    %c0_i32_24 = arith.constant 0 : i32
    %42 = arith.cmpi ne, %arg2, %c0_i32_24 : i32
    %43 = arith.extui %42 : i1 to i32
    %c0_i32_25 = arith.constant 0 : i32
    %44 = arith.cmpi ne, %43, %c0_i32_25 : i32
    scf.if %44 {
      %c0_26 = arith.constant 0 : index
      %c0_27 = arith.constant 0 : index
      %c0_28 = arith.constant 0 : index
      %45 = vector.load %arg14[%c0_26, %c0_27, %c0_28] : memref<1x8x32xf32, #tpu.memory_space<vmem>>, vector<1x8x32xf32>
      %46 = vector.shape_cast %45 : vector<1x8x32xf32> to vector<8x32xf32>
      %47 = arith.addf %46, %38 : vector<8x32xf32>
      %c0_29 = arith.constant 0 : index
      %c0_30 = arith.constant 0 : index
      %c0_31 = arith.constant 0 : index
      %48 = vector.load %arg14[%c0_29, %c0_30, %c0_31] : memref<1x8x32xf32, #tpu.memory_space<vmem>>, vector<1x8x32xf32>
      %49 = vector.shape_cast %48 : vector<1x8x32xf32> to vector<8x32xf32>
      %50 = vector.shape_cast %47 : vector<8x32xf32> to vector<1x8x32xf32>
      tpu.vector_store %arg14[%c0_29, %c0_30, %c0_31], %50 {strides = array<i32>} : memref<1x8x32xf32, #tpu.memory_space<vmem>>, vector<1x8x32xf32>,
    } else {
    }
    return
  }
  func.func @transform_0(%arg0: i32, %arg1: i32, %arg2: i32) -> (i32, i32, i32) {
    %c0_i32 = arith.constant 0 : i32
    %c0_i32_0 = arith.constant 0 : i32
    return %arg0, %arg1, %c0_i32 : i32, i32, i32
  }
  func.func @transform_1(%arg0: i32, %arg1: i32, %arg2: i32) -> (i32, i32, i32) {
    %c0_i32 = arith.constant 0 : i32
    %c0_i32_0 = arith.constant 0 : i32
    %c0_i32_1 = arith.constant 0 : i32
    return %arg0, %c0_i32, %c0_i32_0 : i32, i32, i32
  }
  func.func @transform_2(%arg0: i32, %arg1: i32, %arg2: i32) -> (i32, i32, i32) {
    %c0_i32 = arith.constant 0 : i32
    %c0_i32_0 = arith.constant 0 : i32
    %c0_i32_1 = arith.constant 0 : i32
    return %arg0, %c0_i32, %c0_i32_0 : i32, i32, i32
  }
  func.func @transform_3(%arg0: i32, %arg1: i32, %arg2: i32) -> (i32, i32, i32) {
    %c0_i32 = arith.constant 0 : i32
    %c0_i32_0 = arith.constant 0 : i32
    %c0_i32_1 = arith.constant 0 : i32
    %c0_i32_2 = arith.constant 0 : i32
    return %c0_i32, %c0_i32_0, %c0_i32_1 : i32, i32, i32
  }
  func.func @transform_4(%arg0: i32, %arg1: i32, %arg2: i32) -> (i32, i32, i32) {
    %c0_i32 = arith.constant 0 : i32
    %c0_i32_0 = arith.constant 0 : i32
    %c0_i32_1 = arith.constant 0 : i32
    %c0_i32_2 = arith.constant 0 : i32
    return %c0_i32, %c0_i32_0, %c0_i32_1 : i32, i32, i32
  }
  func.func @transform_5(%arg0: i32, %arg1: i32, %arg2: i32) -> (i32, i32, i32) {
    %c0_i32 = arith.constant 0 : i32
    %c0_i32_0 = arith.constant 0 : i32
    %c0_i32_1 = arith.constant 0 : i32
    %c0_i32_2 = arith.constant 0 : i32
    return %c0_i32, %c0_i32_0, %c0_i32_1 : i32, i32, i32
  }
  func.func @transform_6(%arg0: i32, %arg1: i32, %arg2: i32) -> (i32, i32, i32) {
    %c0_i32 = arith.constant 0 : i32
    %c0_i32_0 = arith.constant 0 : i32
    %c0_i32_1 = arith.constant 0 : i32
    %c0_i32_2 = arith.constant 0 : i32
    return %c0_i32, %c0_i32_0, %c0_i32_1 : i32, i32, i32
  }
  func.func @transform_7(%arg0: i32, %arg1: i32, %arg2: i32) -> (i32, i32, i32) {
    %c0_i32 = arith.constant 0 : i32
    %c0_i32_0 = arith.constant 0 : i32
    %c0_i32_1 = arith.constant 0 : i32
    %c0_i32_2 = arith.constant 0 : i32
    return %c0_i32, %c0_i32_0, %c0_i32_1 : i32, i32, i32
  }
  func.func @transform_8(%arg0: i32, %arg1: i32, %arg2: i32) -> (i32, i32, i32) {
    %c0_i32 = arith.constant 0 : i32
    %c0_i32_0 = arith.constant 0 : i32
    %c0_i32_1 = arith.constant 0 : i32
    %c0_i32_2 = arith.constant 0 : i32
    return %c0_i32, %c0_i32_0, %c0_i32_1 : i32, i32, i32
  }
  func.func @transform_9(%arg0: i32, %arg1: i32, %arg2: i32) -> (i32, i32, i32) {
    %c0_i32 = arith.constant 0 : i32
    %c0_i32_0 = arith.constant 0 : i32
    %c0_i32_1 = arith.constant 0 : i32
    %c0_i32_2 = arith.constant 0 : i32
    return %c0_i32, %c0_i32_0, %c0_i32_1 : i32, i32, i32
  }
  func.func @transform_10(%arg0: i32, %arg1: i32, %arg2: i32) -> (i32, i32) {
    %c0_i32 = arith.constant 0 : i32
    %c0_i32_0 = arith.constant 0 : i32
    %c0_i32_1 = arith.constant 0 : i32
    return %c0_i32, %c0_i32_0 : i32, i32
  }
  func.func @transform_11(%arg0: i32, %arg1: i32, %arg2: i32) -> (i32, i32, i32) {
    %c0_i32 = arith.constant 0 : i32
    %c0_i32_0 = arith.constant 0 : i32
    return %arg0, %arg1, %c0_i32 : i32, i32, i32
  }
  func.func @transform_12(%arg0: i32, %arg1: i32, %arg2: i32) -> (i32, i32, i32, i32) {
    %c0_i32 = arith.constant 0 : i32
    %c0_i32_0 = arith.constant 0 : i32
    return %arg0, %arg2, %arg1, %c0_i32 : i32, i32, i32, i32
  }
}

</mosaic_0001>

<llo_original>
// kernel: tpu_custom_call.1
$region0: #{tpu_custom_call.1}
  #allocation0 [shape = 'u32[]', space=smem, size = 0x4, offset = 0x4, fixed_abs, tag = 'smem constant byte address 0x4 - core index']
  #allocation1 [shape = 'u32[72,128]{1,0:T(1,128)}', space=vmem, size = 0x9000, scoped, tag = 'internal scratch']
  #allocation2 [shape = 'f32[4,8,8]{2,1,0:T(8,128)}', space=vmem, size = 0x4000, scoped, tag = 'scratch operand']
  #allocation3 [shape = 'f32[4,8,8]{2,1,0:T(8,128)}', space=vmem, size = 0x4000, scoped, tag = 'scratch operand']
  %s0 = inlined_call_operand.vmem [shape: f32[2,8,32], index: 0, kind: input, shape index: {}]
  %s1 = inlined_call_operand.vmem [shape: f32[2,8,32], index: 1, kind: input, shape index: {}]
  %s2 = inlined_call_operand.vmem [shape: f32[2,8,32], index: 2, kind: input, shape index: {}]
  %s3 = inlined_call_operand.vmem [shape: f32[4,32,8], index: 3, kind: input, shape index: {}]
  %s4 = inlined_call_operand.vmem [shape: f32[4,1,8], index: 4, kind: input, shape index: {}]
  %s5 = inlined_call_operand.vmem [shape: f32[4,32,8], index: 5, kind: input, shape index: {}]
  %s6 = inlined_call_operand.vmem [shape: f32[4,1,8], index: 6, kind: input, shape index: {}]
  %s7 = inlined_call_operand.vmem [shape: f32[4,32,8], index: 7, kind: input, shape index: {}]
  %s8 = inlined_call_operand.vmem [shape: f32[4,1,8], index: 8, kind: input, shape index: {}]
  %s9 = inlined_call_operand.vmem [shape: f32[4,8,32], index: 9, kind: input, shape index: {}]
  %s10 = inlined_call_operand.vmem [shape: f32[1,32], index: 10, kind: input, shape index: {}]
  %s11 = inlined_call_operand.hbm [shape: f32[2,8,32], index: 11, kind: output, shape index: {0}]
  %s12 = inlined_call_operand.hbm [shape: f32[2,4,8,8], index: 12, kind: output, shape index: {1}]
  %13 = xla_tuple %s11, %s12
  %s14 = sld [smem:[#allocation0]]
  $region97: #{tpu_custom_call.1} parent=0
    _
  %s16 = ssub.s32 1, %s14
  %s17 = scalar_select 0, %s16, %s14
  $region1: #{tpu_custom_call.1} parent=0
    #allocation4 [shape = 'u8[8192]{0}', space=vmem, size = 0x2000, scoped, tag = 'output window, operand 0']
    #allocation5 [shape = 's32[2]{0}', space=sflag, size = 0x8, scoped, tag = 'scoped memory for tpu_custom_call.1']
    #allocation6 [shape = 'u8[8192]{0}', space=vmem, size = 0x2000, scoped, tag = 'output window, operand 1']
    #allocation7 [shape = 's32[2]{0}', space=sflag, size = 0x8, scoped, tag = 'scoped memory for tpu_custom_call.1']
    %18 = vsyncpa [#allocation5], 0
    %s19 = scalar_lea.sflag [#allocation5], 1
    %20 = vsyncpa %s19, 0
    %21 = vsyncpa [#allocation7], 0
    %s22 = scalar_lea.sflag [#allocation7], 1
    %23 = vsyncpa %s22, 0
    loop: start=0, step=1, limit=10
    $region2: #{tpu_custom_call.1} parent=1 // loop_pre_header
      _
    $region3: #{tpu_custom_call.1} parent=1 // loop_header
      %s25 = sphi 0, %s29
      %p26 = scmp.ge.s32.totalorder %s25, 10
      %s32 = sphi 0, %s51
      %s33 = sphi 0, %s47
      %s34 = sphi 0, %s43
      %s35 = sphi 0, %s32
      %s36 = sphi 0, %s33
      %s37 = sphi 0, %s34
      %s38 = sphi 0, %s35
      %s39 = sphi 0, %s36
      %s40 = sphi 0, %s37
      %s56 = sphi 0, %s58
      %s59 = sphi 0, %s56
      %s60 = sphi 0, %s59
      %s76 = sphi 0, %s60
      %s82 = sphi 0, %s84
      %s85 = sphi 0, %s82
      %s86 = sphi 0, %s85
      %s102 = sphi 0, %s86
      %s108 = sphi 0, %s110
      %s111 = sphi 0, %s108
      %s112 = sphi 0, %s111
      %s128 = sphi 0, %s112
      %s132 = sphi 0, %s132
      %s134 = sphi 0, %s132
      %s135 = sphi 0, %s134
      %s149 = sphi 0, %s135
      %s153 = sphi 0, %s153
      %s155 = sphi 0, %s153
      %s156 = sphi 0, %s155
      %s170 = sphi 0, %s156
      %s174 = sphi 0, %s174
      %s176 = sphi 0, %s174
      %s177 = sphi 0, %s176
      %s191 = sphi 0, %s177
      %s195 = sphi 0, %s195
      %s197 = sphi 0, %s195
      %s198 = sphi 0, %s197
      %s212 = sphi 0, %s198
      %s216 = sphi 0, %s216
      %s218 = sphi 0, %s216
      %s219 = sphi 0, %s218
      %s233 = sphi 0, %s219
      %s237 = sphi 0, %s237
      %s239 = sphi 0, %s237
      %s240 = sphi 0, %s239
      %s254 = sphi 0, %s240
      %s258 = sphi 0, %s258
      %s260 = sphi 0, %s258
      %s261 = sphi 0, %s260
      %s275 = sphi 0, %s261
      %s279 = sphi 0, %s279
      %s281 = sphi 0, %s279
      %s282 = sphi 0, %s281
      %s296 = sphi 0, %s282
      %s304 = sphi 0, %s306
      %s307 = sphi 0, %s304
      %s308 = sphi 0, %s307
      %s324 = sphi 0, %s308
      %s334 = sphi 0, %s336
      %s337 = sphi 0, %s334
      %s338 = sphi 0, %s337
      %s354 = sphi 0, %s338
    $region4: #{tpu_custom_call.1} parent=1 // loop_header_branch
      %28 = sbr.rel (%p26) target = $region8
    $region5: #{tpu_custom_call.1} parent=1 // loop_body
      %s30 = ssub.s32 %s25, 1
      %s31 = ssub.s32 %s25, 2
      %s41 = sadd.s32 1, %s34
      %p42 = scmp.ge.s32.totalorder %s41, 4
      %s43 = scalar_select %p42, 0, %s41
      %s44 = sadd.s32 1, %s33
      %s45 = scalar_select %p42, %s44, %s33
      %p46 = scmp.ge.s32.totalorder %s45, 1
      %s47 = scalar_select %p46, 0, %s45
      %s48 = sadd.s32 1, %s32
      %s49 = scalar_select %p46, %s48, %s32
      %p50 = scmp.ge.s32.totalorder %s49, 2
      %s51 = scalar_select %p50, 0, %s49
      %s52 = ssub.s32 %s32, %s51
      %s53 = ssub.s32 %s33, %s47
      %s54 = sor.u32 %s52, %s53
      %p55 = scmp.eq.s32.totalorder %s54, 0
      %s57 = sadd.s32 %s56, 1
      %s58 = scalar_select %p55, %s56, %s57
      %p61 = pneg %p55
      %p62 = scmp.eq.s32.totalorder %s25, 7
      %p63 = por %p61, %p62
      %p64 = scmp.ne.s32.totalorder %s56, %s59
      %p65 = scmp.eq.s32.totalorder %s25, 0
      %p66 = por %p64, %p65
      %p67 = scmp.ne.s32.totalorder %s56, %s59
      %p68 = scmp.eq.s32.totalorder %s30, 7
      %p69 = por %p67, %p68
      %p70 = scmp.ne.s32.totalorder %s59, %s60
      %p71 = scmp.eq.s32.totalorder %s30, 0
      %p72 = por %p70, %p71
      %p73 = scmp.ne.s32.totalorder %s59, %s60
      %p74 = scmp.eq.s32.totalorder %s31, 7
      %p75 = por %p73, %p74
      %p77 = scmp.ne.s32.totalorder %s60, %s76
      %p78 = scmp.eq.s32.totalorder %s31, 0
      %p79 = por %p77, %p78
      %s80 = ssub.s32 %s32, %s51
      %p81 = scmp.eq.s32.totalorder %s80, 0
      %s83 = sadd.s32 %s82, 1
      %s84 = scalar_select %p81, %s82, %s83
      %p87 = pneg %p81
      %p88 = scmp.eq.s32.totalorder %s25, 7
      %p89 = por %p87, %p88
      %p90 = scmp.ne.s32.totalorder %s82, %s85
      %p91 = scmp.eq.s32.totalorder %s25, 0
      %p92 = por %p90, %p91
      %p93 = scmp.ne.s32.totalorder %s82, %s85
      %p94 = scmp.eq.s32.totalorder %s30, 7
      %p95 = por %p93, %p94
      %p96 = scmp.ne.s32.totalorder %s85, %s86
      %p97 = scmp.eq.s32.totalorder %s30, 0
      %p98 = por %p96, %p97
      %p99 = scmp.ne.s32.totalorder %s85, %s86
      %p100 = scmp.eq.s32.totalorder %s31, 7
      %p101 = por %p99, %p100
      %p103 = scmp.ne.s32.totalorder %s86, %s102
      %p104 = scmp.eq.s32.totalorder %s31, 0
      %p105 = por %p103, %p104
      %s106 = ssub.s32 %s32, %s51
      %p107 = scmp.eq.s32.totalorder %s106, 0
      %s109 = sadd.s32 %s108, 1
      %s110 = scalar_select %p107, %s108, %s109
      %p113 = pneg %p107
      %p114 = scmp.eq.s32.totalorder %s25, 7
      %p115 = por %p113, %p114
      %p116 = scmp.ne.s32.totalorder %s108, %s111
      %p117 = scmp.eq.s32.totalorder %s25, 0
      %p118 = por %p116, %p117
      %p119 = scmp.ne.s32.totalorder %s108, %s111
      %p120 = scmp.eq.s32.totalorder %s30, 7
      %p121 = por %p119, %p120
      %p122 = scmp.ne.s32.totalorder %s111, %s112
      %p123 = scmp.eq.s32.totalorder %s30, 0
      %p124 = por %p122, %p123
      %p125 = scmp.ne.s32.totalorder %s111, %s112
      %p126 = scmp.eq.s32.totalorder %s31, 7
      %p127 = por %p125, %p126
      %p129 = scmp.ne.s32.totalorder %s112, %s128
      %p130 = scmp.eq.s32.totalorder %s31, 0
      %p131 = por %p129, %p130
      %s133 = sadd.s32 %s132, 1
      %p136 = scmp.eq.s32.totalorder %s25, 7
      %p137 = scmp.ne.s32.totalorder %s132, %s134
      %p138 = scmp.eq.s32.totalorder %s25, 0
      %p139 = por %p137, %p138
      %p140 = scmp.ne.s32.totalorder %s132, %s134
      %p141 = scmp.eq.s32.totalorder %s30, 7
      %p142 = por %p140, %p141
      %p143 = scmp.ne.s32.totalorder %s134, %s135
      %p144 = scmp.eq.s32.totalorder %s30, 0
      %p145 = por %p143, %p144
      %p146 = scmp.ne.s32.totalorder %s134, %s135
      %p147 = scmp.eq.s32.totalorder %s31, 7
      %p148 = por %p146, %p147
      %p150 = scmp.ne.s32.totalorder %s135, %s149
      %p151 = scmp.eq.s32.totalorder %s31, 0
      %p152 = por %p150, %p151
      %s154 = sadd.s32 %s153, 1
      %p157 = scmp.eq.s32.totalorder %s25, 7
      %p158 = scmp.ne.s32.totalorder %s153, %s155
      %p159 = scmp.eq.s32.totalorder %s25, 0
      %p160 = por %p158, %p159
      %p161 = scmp.ne.s32.totalorder %s153, %s155
      %p162 = scmp.eq.s32.totalorder %s30, 7
      %p163 = por %p161, %p162
      %p164 = scmp.ne.s32.totalorder %s155, %s156
      %p165 = scmp.eq.s32.totalorder %s30, 0
      %p166 = por %p164, %p165
      %p167 = scmp.ne.s32.totalorder %s155, %s156
      %p168 = scmp.eq.s32.totalorder %s31, 7
      %p169 = por %p167, %p168
      %p171 = scmp.ne.s32.totalorder %s156, %s170
      %p172 = scmp.eq.s32.totalorder %s31, 0
      %p173 = por %p171, %p172
      %s175 = sadd.s32 %s174, 1
      %p178 = scmp.eq.s32.totalorder %s25, 7
      %p179 = scmp.ne.s32.totalorder %s174, %s176
      %p180 = scmp.eq.s32.totalorder %s25, 0
      %p181 = por %p179, %p180
      %p182 = scmp.ne.s32.totalorder %s174, %s176
      %p183 = scmp.eq.s32.totalorder %s30, 7
      %p184 = por %p182, %p183
      %p185 = scmp.ne.s32.totalorder %s176, %s177
      %p186 = scmp.eq.s32.totalorder %s30, 0
      %p187 = por %p185, %p186
      %p188 = scmp.ne.s32.totalorder %s176, %s177
      %p189 = scmp.eq.s32.totalorder %s31, 7
      %p190 = por %p188, %p189
      %p192 = scmp.ne.s32.totalorder %s177, %s191
      %p193 = scmp.eq.s32.totalorder %s31, 0
      %p194 = por %p192, %p193
      %s196 = sadd.s32 %s195, 1
      %p199 = scmp.eq.s32.totalorder %s25, 7
      %p200 = scmp.ne.s32.totalorder %s195, %s197
      %p201 = scmp.eq.s32.totalorder %s25, 0
      %p202 = por %p200, %p201
      %p203 = scmp.ne.s32.totalorder %s195, %s197
      %p204 = scmp.eq.s32.totalorder %s30, 7
      %p205 = por %p203, %p204
      %p206 = scmp.ne.s32.totalorder %s197, %s198
      %p207 = scmp.eq.s32.totalorder %s30, 0
      %p208 = por %p206, %p207
      %p209 = scmp.ne.s32.totalorder %s197, %s198
      %p210 = scmp.eq.s32.totalorder %s31, 7
      %p211 = por %p209, %p210
      %p213 = scmp.ne.s32.totalorder %s198, %s212
      %p214 = scmp.eq.s32.totalorder %s31, 0
      %p215 = por %p213, %p214
      %s217 = sadd.s32 %s216, 1
      %p220 = scmp.eq.s32.totalorder %s25, 7
      %p221 = scmp.ne.s32.totalorder %s216, %s218
      %p222 = scmp.eq.s32.totalorder %s25, 0
      %p223 = por %p221, %p222
      %p224 = scmp.ne.s32.totalorder %s216, %s218
      %p225 = scmp.eq.s32.totalorder %s30, 7
      %p226 = por %p224, %p225
      %p227 = scmp.ne.s32.totalorder %s218, %s219
      %p228 = scmp.eq.s32.totalorder %s30, 0
      %p229 = por %p227, %p228
      %p230 = scmp.ne.s32.totalorder %s218, %s219
      %p231 = scmp.eq.s32.totalorder %s31, 7
      %p232 = por %p230, %p231
      %p234 = scmp.ne.s32.totalorder %s219, %s233
      %p235 = scmp.eq.s32.totalorder %s31, 0
      %p236 = por %p234, %p235
      %s238 = sadd.s32 %s237, 1
      %p241 = scmp.eq.s32.totalorder %s25, 7
      %p242 = scmp.ne.s32.totalorder %s237, %s239
      %p243 = scmp.eq.s32.totalorder %s25, 0
      %p244 = por %p242, %p243
      %p245 = scmp.ne.s32.totalorder %s237, %s239
      %p246 = scmp.eq.s32.totalorder %s30, 7
      %p247 = por %p245, %p246
      %p248 = scmp.ne.s32.totalorder %s239, %s240
      %p249 = scmp.eq.s32.totalorder %s30, 0
      %p250 = por %p248, %p249
      %p251 = scmp.ne.s32.totalorder %s239, %s240
      %p252 = scmp.eq.s32.totalorder %s31, 7
      %p253 = por %p251, %p252
      %p255 = scmp.ne.s32.totalorder %s240, %s254
      %p256 = scmp.eq.s32.totalorder %s31, 0
      %p257 = por %p255, %p256
      %s259 = sadd.s32 %s258, 1
      %p262 = scmp.eq.s32.totalorder %s25, 7
      %p263 = scmp.ne.s32.totalorder %s258, %s260
      %p264 = scmp.eq.s32.totalorder %s25, 0
      %p265 = por %p263, %p264
      %p266 = scmp.ne.s32.totalorder %s258, %s260
      %p267 = scmp.eq.s32.totalorder %s30, 7
      %p268 = por %p266, %p267
      %p269 = scmp.ne.s32.totalorder %s260, %s261
      %p270 = scmp.eq.s32.totalorder %s30, 0
      %p271 = por %p269, %p270
      %p272 = scmp.ne.s32.totalorder %s260, %s261
      %p273 = scmp.eq.s32.totalorder %s31, 7
      %p274 = por %p272, %p273
      %p276 = scmp.ne.s32.totalorder %s261, %s275
      %p277 = scmp.eq.s32.totalorder %s31, 0
      %p278 = por %p276, %p277
      %s280 = sadd.s32 %s279, 1
      %p283 = scmp.eq.s32.totalorder %s25, 7
      %p284 = scmp.ne.s32.totalorder %s279, %s281
      %p285 = scmp.eq.s32.totalorder %s25, 0
      %p286 = por %p284, %p285
      %p287 = scmp.ne.s32.totalorder %s279, %s281
      %p288 = scmp.eq.s32.totalorder %s30, 7
      %p289 = por %p287, %p288
      %p290 = scmp.ne.s32.totalorder %s281, %s282
      %p291 = scmp.eq.s32.totalorder %s30, 0
      %p292 = por %p290, %p291
      %p293 = scmp.ne.s32.totalorder %s281, %s282
      %p294 = scmp.eq.s32.totalorder %s31, 7
      %p295 = por %p293, %p294
      %p297 = scmp.ne.s32.totalorder %s282, %s296
      %p298 = scmp.eq.s32.totalorder %s31, 0
      %p299 = por %p297, %p298
      %s300 = ssub.s32 %s32, %s51
      %s301 = ssub.s32 %s33, %s47
      %s302 = sor.u32 %s300, %s301
      %p303 = scmp.eq.s32.totalorder %s302, 0
      %s305 = sadd.s32 %s304, 1
      %s306 = scalar_select %p303, %s304, %s305
      %p309 = pneg %p303
      %p310 = scmp.eq.s32.totalorder %s25, 7
      %p311 = por %p309, %p310
      %p312 = scmp.ne.s32.totalorder %s304, %s307
      %p313 = scmp.eq.s32.totalorder %s25, 0
      %p314 = por %p312, %p313
      %p315 = scmp.ne.s32.totalorder %s304, %s307
      %p316 = scmp.eq.s32.totalorder %s30, 7
      %p317 = por %p315, %p316
      %p318 = scmp.ne.s32.totalorder %s307, %s308
      %p319 = scmp.eq.s32.totalorder %s30, 0
      %p320 = por %p318, %p319
      %p321 = scmp.ne.s32.totalorder %s307, %s308
      %p322 = scmp.eq.s32.totalorder %s31, 7
      %p323 = por %p321, %p322
      %p325 = scmp.ne.s32.totalorder %s308, %s324
      %p326 = scmp.eq.s32.totalorder %s31, 0
      %p327 = por %p325, %p326
      %s328 = ssub.s32 %s32, %s51
      %s329 = ssub.s32 %s34, %s43
      %s330 = sor.u32 %s328, %s329
      %s331 = ssub.s32 %s33, %s47
      %s332 = sor.u32 %s330, %s331
      %p333 = scmp.eq.s32.totalorder %s332, 0
      %s335 = sadd.s32 %s334, 1
      %s336 = scalar_select %p333, %s334, %s335
      %p339 = pneg %p333
      %p340 = scmp.eq.s32.totalorder %s25, 7
      %p341 = por %p339, %p340
      %p342 = scmp.ne.s32.totalorder %s334, %s337
      %p343 = scmp.eq.s32.totalorder %s25, 0
      %p344 = por %p342, %p343
      %p345 = scmp.ne.s32.totalorder %s334, %s337
      %p346 = scmp.eq.s32.totalorder %s30, 7
      %p347 = por %p345, %p346
      %p348 = scmp.ne.s32.totalorder %s337, %s338
      %p349 = scmp.eq.s32.totalorder %s30, 0
      %p350 = por %p348, %p349
      %p351 = scmp.ne.s32.totalorder %s337, %s338
      %p352 = scmp.eq.s32.totalorder %s31, 7
      %p353 = por %p351, %p352
      %p355 = scmp.ne.s32.totalorder %s338, %s354
      %p356 = scmp.eq.s32.totalorder %s31, 0
      %p357 = por %p355, %p356
      %p358 = scmp.le.s32.totalorder 1, %s25
      %p359 = scmp.lt.s32.totalorder %s25, 9
      %p360 = pnand %p358, %p359
      %p361 = pneg %p360
      // Predicated region
      $region9: #{tpu_custom_call.1} parent=5 // pred_check
        _
      $region10: #{tpu_custom_call.1} parent=5 // pred_check_branch
        %363 = sbr.rel (%p360) target = $region12
      $region11: #{tpu_custom_call.1} parent=5 // pred_region
        %s364 = ssub.s32 %s25, 1
        // Predicated region
        $region13: #{tpu_custom_call.1} parent=11 // pred_check
          %p365 = pneg %p145
        $region14: #{tpu_custom_call.1} parent=11 // pred_check_branch
          %367 = sbr.rel (%p365) target = $region16
        $region15: #{tpu_custom_call.1} parent=11 // pred_region
          _
        $region16: #{tpu_custom_call.1} parent=11 // pred_fallthru
          _
        // Predicated region
        $region17: #{tpu_custom_call.1} parent=11 // pred_check
          %p368 = pneg %p166
        $region18: #{tpu_custom_call.1} parent=11 // pred_check_branch
          %370 = sbr.rel (%p368) target = $region20
        $region19: #{tpu_custom_call.1} parent=11 // pred_region
          _
        $region20: #{tpu_custom_call.1} parent=11 // pred_fallthru
          _
        // Predicated region
        $region21: #{tpu_custom_call.1} parent=11 // pred_check
          %p371 = pneg %p187
        $region22: #{tpu_custom_call.1} parent=11 // pred_check_branch
          %373 = sbr.rel (%p371) target = $region24
        $region23: #{tpu_custom_call.1} parent=11 // pred_region
          _
        $region24: #{tpu_custom_call.1} parent=11 // pred_fallthru
          _
        // Predicated region
        $region25: #{tpu_custom_call.1} parent=11 // pred_check
          %p374 = pneg %p208
        $region26: #{tpu_custom_call.1} parent=11 // pred_check_branch
          %376 = sbr.rel (%p374) target = $region28
        $region27: #{tpu_custom_call.1} parent=11 // pred_region
          _
        $region28: #{tpu_custom_call.1} parent=11 // pred_fallthru
          _
        // Predicated region
        $region29: #{tpu_custom_call.1} parent=11 // pred_check
          %p377 = pneg %p229
        $region30: #{tpu_custom_call.1} parent=11 // pred_check_branch
          %379 = sbr.rel (%p377) target = $region32
        $region31: #{tpu_custom_call.1} parent=11 // pred_region
          _
        $region32: #{tpu_custom_call.1} parent=11 // pred_fallthru
          _
        // Predicated region
        $region33: #{tpu_custom_call.1} parent=11 // pred_check
          %p380 = pneg %p250
        $region34: #{tpu_custom_call.1} parent=11 // pred_check_branch
          %382 = sbr.rel (%p380) target = $region36
        $region35: #{tpu_custom_call.1} parent=11 // pred_region
          _
        $region36: #{tpu_custom_call.1} parent=11 // pred_fallthru
          _
        // Predicated region
        $region37: #{tpu_custom_call.1} parent=11 // pred_check
          %p383 = pneg %p271
        $region38: #{tpu_custom_call.1} parent=11 // pred_check_branch
          %385 = sbr.rel (%p383) target = $region40
        $region39: #{tpu_custom_call.1} parent=11 // pred_region
          _
        $region40: #{tpu_custom_call.1} parent=11 // pred_fallthru
          _
        // Predicated region
        $region41: #{tpu_custom_call.1} parent=11 // pred_check
          %p386 = pneg %p292
        $region42: #{tpu_custom_call.1} parent=11 // pred_check_branch
          %388 = sbr.rel (%p386) target = $region44
        $region43: #{tpu_custom_call.1} parent=11 // pred_region
          _
        $region44: #{tpu_custom_call.1} parent=11 // pred_fallthru
          _
      $region12: #{tpu_custom_call.1} parent=5 // pred_fallthru
        _
      %p389 = scmp.lt.s32.totalorder %s25, 8
      // Predicated region
      $region45: #{tpu_custom_call.1} parent=5 // pred_check
        %p390 = pneg %p389
      $region46: #{tpu_custom_call.1} parent=5 // pred_check_branch
        %392 = sbr.rel (%p390) target = $region48
      $region47: #{tpu_custom_call.1} parent=5 // pred_region
        // Predicated region
        $region49: #{tpu_custom_call.1} parent=47 // pred_check
          %p393 = pneg %p66
        $region50: #{tpu_custom_call.1} parent=47 // pred_check_branch
          %395 = sbr.rel (%p393) target = $region52
        $region51: #{tpu_custom_call.1} parent=47 // pred_region
          %p396 = scmp.lt.s32.totalorder %s32, 1
          %s397 = scalar_select %p396, %s32, 1
          %p398 = scmp.lt.s32.totalorder %s33, 0
          %s399 = scalar_select %p398, %s33, 0
          %s400 = sadd.s32 %s399, %s397
          %s401 = smul.addr %s400, 8
          %s402 = scalar_lea.vmem %s0, %s401
        $region52: #{tpu_custom_call.1} parent=47 // pred_fallthru
          _
        // Predicated region
        $region53: #{tpu_custom_call.1} parent=47 // pred_check
          %p403 = pneg %p92
        $region54: #{tpu_custom_call.1} parent=47 // pred_check_branch
          %405 = sbr.rel (%p403) target = $region56
        $region55: #{tpu_custom_call.1} parent=47 // pred_region
          %p406 = scmp.lt.s32.totalorder %s32, 1
          %s407 = scalar_select %p406, %s32, 1
          %s408 = smul.addr %s407, 8
          %s409 = scalar_lea.vmem %s1, %s408
        $region56: #{tpu_custom_call.1} parent=47 // pred_fallthru
          _
        // Predicated region
        $region57: #{tpu_custom_call.1} parent=47 // pred_check
          %p410 = pneg %p118
        $region58: #{tpu_custom_call.1} parent=47 // pred_check_branch
          %412 = sbr.rel (%p410) target = $region60
        $region59: #{tpu_custom_call.1} parent=47 // pred_region
          %p413 = scmp.lt.s32.totalorder %s32, 1
          %s414 = scalar_select %p413, %s32, 1
          %s415 = smul.addr %s414, 8
          %s416 = scalar_lea.vmem %s2, %s415
        $region60: #{tpu_custom_call.1} parent=47 // pred_fallthru
          _
      $region48: #{tpu_custom_call.1} parent=5 // pred_fallthru
        _
      %p417 = scmp.le.s32.totalorder 1, %s25
      %p418 = scmp.lt.s32.totalorder %s25, 9
      %p419 = pnand %p417, %p418
      %p420 = pneg %p419
      // Predicated region
      $region61: #{tpu_custom_call.1} parent=5 // pred_check
        _
      $region62: #{tpu_custom_call.1} parent=5 // pred_check_branch
        %422 = sbr.rel (%p419) target = $region64
      $region63: #{tpu_custom_call.1} parent=5 // pred_region
        %s423 = ssub.s32 %s25, 1
        %p424 = scmp.lt.s32.totalorder %s35, 1
        %s425 = scalar_select %p424, %s35, 1
        %p426 = scmp.lt.s32.totalorder %s36, 0
        %s427 = scalar_select %p426, %s36, 0
        %s428 = sadd.s32 %s427, %s425
        %s429 = smul.addr %s428, 8
        %s430 = scalar_lea.vmem %s0, %s429
        %p431 = pneg %p72
        %p432 = pneg %p69
        %p433 = scmp.lt.s32.totalorder %s35, 1
        %s434 = scalar_select %p433, %s35, 1
        %s435 = smul.addr %s434, 8
        %s436 = scalar_lea.vmem %s1, %s435
        %p437 = pneg %p98
        %p438 = pneg %p95
        %p439 = scmp.lt.s32.totalorder %s35, 1
        %s440 = scalar_select %p439, %s35, 1
        %s441 = smul.addr %s440, 8
        %s442 = scalar_lea.vmem %s2, %s441
        %p443 = pneg %p124
        %p444 = pneg %p121
        %p445 = pneg %p145
        %p446 = pneg %p142
        %p447 = pneg %p166
        %p448 = pneg %p163
        %p449 = pneg %p187
        %p450 = pneg %p184
        %p451 = pneg %p208
        %p452 = pneg %p205
        %p453 = pneg %p229
        %p454 = pneg %p226
        %p455 = pneg %p250
        %p456 = pneg %p247
        %p457 = pneg %p271
        %p458 = pneg %p268
        %p459 = pneg %p292
        %p460 = pneg %p289
        %p461 = pneg %p320
        %p462 = pneg %p317
        %s463 = sand.u32 %s307, 1
        %s464 = scalar_lea.sflag [#allocation5], %s463
        %s465 = sand.u32 %s307, 1
        %s466 = smul.addr %s465, 8
        %s467 = scalar_lea.vmem [#allocation4], %s466
        %p468 = pneg %p350
        %p469 = pneg %p347
        %s470 = sand.u32 %s337, 1
        %s471 = scalar_lea.sflag [#allocation7], %s470
        %s472 = sand.u32 %s337, 1
        %s473 = smul.addr %s472, 8
        %s474 = scalar_lea.vmem [#allocation6], %s473
        %p475 = scmp.lt.s32.totalorder %s35, 1
        %s476 = scalar_select %p475, %s35, 1
        %p477 = scmp.lt.s32.totalorder %s36, 0
        %s478 = scalar_select %p477, %s36, 0
        %s479 = sadd.s32 %s478, %s476
        %s480 = smul.addr %s479, 8
        %s481 = scalar_lea.vmem %s0, %s480
        %p482 = scmp.lt.s32.totalorder %s35, 1
        %s483 = scalar_select %p482, %s35, 1
        %s484 = smul.addr %s483, 8
        %s485 = scalar_lea.vmem %s1, %s484
        %p486 = scmp.lt.s32.totalorder %s35, 1
        %s487 = scalar_select %p486, %s35, 1
        %s488 = smul.addr %s487, 8
        %s489 = scalar_lea.vmem %s2, %s488
        %p490 = scmp.eq.s32.totalorder %s36, 0
        // Predicated region
        $region65: #{tpu_custom_call.1} parent=63 // pred_check
          %p491 = pneg %p490
        $region66: #{tpu_custom_call.1} parent=63 // pred_check_branch
          %493 = sbr.rel (%p491) target = $region68
        $region67: #{tpu_custom_call.1} parent=63 // pred_region
          %v494 = vld [vmem:[%s485] sm:$0xff]
          %s495 = smul.u32 %s37, 32
          %s496 = scalar_lea.vmem %s5, %s495
          %v497 = vld [vmem:[%s496] sm:$0xff]
          %v498 = vld [vmem:[%s496 + $0x8] sm:$0xff]
          %v499 = vld [vmem:[%s496 + $0x10] sm:$0xff]
          %v500 = vld [vmem:[%s496 + $0x18] sm:$0xff]
          %s501 = scalar_lea.vmem %s6, %s37
          %v502 = vld [vmem:[%s501] sm:$0x1]
          %v504 = vperm.slane %v502, 0
          %vm506 = vcmask 261120
          %v508 = vsel %vm506, %v494, 0
          %510 = vmatpush.msra.mxu0 0.0
          %511 = vmatpush.msra.mxu0 0.0
          %512 = vmatpush.msra.mxu0 0.0
          %513 = vmatpush.msra.mxu0 0.0
          %514 = vmatpush.msra.mxu0 0.0
          %515 = vmatpush.msra.mxu0 0.0
          %516 = vmatpush.msra.mxu0 0.0
          %517 = vmatpush.msra.mxu0 0.0
          %518 = vmatpush.msra.mxu0 0.0
          %519 = vmatpush.msra.mxu0 0.0
          %520 = vmatpush.msra.mxu0 0.0
          %521 = vmatpush.msra.mxu0 0.0
          %522 = vmatpush.msra.mxu0 %v500
          %523 = vmatpush.msra.mxu0 %v499
          %524 = vmatpush.msra.mxu0 %v498
          %525 = vmatpush.msra.mxu0 %v497
          %526 = vmatmul.f32.gmra.mxu0 %v508
          %v527 = vpop.f32.mrf.mxu0
          %v528 = vadd.f32 %v504, %v527
          %529 = vdwg.mxu0
          %v530 = vld [vmem:[%s489] sm:$0xff]
          %s531 = scalar_lea.vmem %s7, %s495
          %v532 = vld [vmem:[%s531] sm:$0xff]
          %v533 = vld [vmem:[%s531 + $0x8] sm:$0xff]
          %v534 = vld [vmem:[%s531 + $0x10] sm:$0xff]
          %v535 = vld [vmem:[%s531 + $0x18] sm:$0xff]
          %s536 = scalar_lea.vmem %s8, %s37
          %v537 = vld [vmem:[%s536] sm:$0x1]
          %v539 = vperm.slane %v537, 0
          %v542 = vsel %vm506, %v530, 0
          %544 = vmatpush.msra.mxu0 0.0
          %545 = vmatpush.msra.mxu0 0.0
          %546 = vmatpush.msra.mxu0 0.0
          %547 = vmatpush.msra.mxu0 0.0
          %548 = vmatpush.msra.mxu0 0.0
          %549 = vmatpush.msra.mxu0 0.0
          %550 = vmatpush.msra.mxu0 0.0
          %551 = vmatpush.msra.mxu0 0.0
          %552 = vmatpush.msra.mxu0 0.0
          %553 = vmatpush.msra.mxu0 0.0
          %554 = vmatpush.msra.mxu0 0.0
          %555 = vmatpush.msra.mxu0 0.0
          %556 = vmatpush.msra.mxu0 %v535
          %557 = vmatpush.msra.mxu0 %v534
          %558 = vmatpush.msra.mxu0 %v533
          %559 = vmatpush.msra.mxu0 %v532
          %560 = vmatmul.f32.gmra.mxu0 %v542
          %v561 = vpop.f32.mrf.mxu0
          %v562 = vadd.f32 %v539, %v561
          %563 = vdwg.mxu0
          %s564 = smul.u32 %s37, 8
          %s565 = scalar_lea.vmem [#allocation2], %s564
          %vm566 = vcmask 64512
          %567 = vst.msk [vmem:[%s565] sm:$0xff] %vm566, %v528
          %s568 = scalar_lea.vmem [#allocation3], %s564
          %569 = vst.msk [vmem:[%s568] sm:$0xff] %vm566, %v562
        $region68: #{tpu_custom_call.1} parent=63 // pred_fallthru
          _
        %v570 = vld [vmem:[%s481] sm:$0xff]
        %s571 = smul.u32 %s37, 32
        %s572 = scalar_lea.vmem %s3, %s571
        %v573 = vld [vmem:[%s572] sm:$0xff]
        %v574 = vld [vmem:[%s572 + $0x8] sm:$0xff]
        %v575 = vld [vmem:[%s572 + $0x10] sm:$0xff]
        %v576 = vld [vmem:[%s572 + $0x18] sm:$0xff]
        %s577 = scalar_lea.vmem %s4, %s37
        %v578 = vld [vmem:[%s577] sm:$0x1]
        %v580 = vperm.slane %v578, 0
        %vm582 = vcmask 261120
        %v584 = vsel %vm582, %v570, 0
        %586 = vmatpush.msra.mxu0 0.0
        %587 = vmatpush.msra.mxu0 0.0
        %588 = vmatpush.msra.mxu0 0.0
        %589 = vmatpush.msra.mxu0 0.0
        %590 = vmatpush.msra.mxu0 0.0
        %591 = vmatpush.msra.mxu0 0.0
        %592 = vmatpush.msra.mxu0 0.0
        %593 = vmatpush.msra.mxu0 0.0
        %594 = vmatpush.msra.mxu0 0.0
        %595 = vmatpush.msra.mxu0 0.0
        %596 = vmatpush.msra.mxu0 0.0
        %597 = vmatpush.msra.mxu0 0.0
        %598 = vmatpush.msra.mxu0 %v576
        %599 = vmatpush.msra.mxu0 %v575
        %600 = vmatpush.msra.mxu0 %v574
        %601 = vmatpush.msra.mxu0 %v573
        %602 = vmatmul.f32.gmra.mxu0 %v584
        %v603 = vpop.f32.mrf.mxu0
        %v604 = vadd.f32 %v580, %v603
        %605 = vdwg.mxu0
        %s606 = smul.u32 %s37, 8
        %s607 = scalar_lea.vmem [#allocation2], %s606
        %v608 = vld [vmem:[%s607] sm:$0xff]
        %s609 = scalar_lea.vmem [#allocation3], %s606
        %v610 = vld [vmem:[%s609] sm:$0xff]
        %vm611 = vcmask 64512
        %v613 = vsel %vm611, %v604, 0
        %v616 = vsel %vm611, %v608, 0
        %618 = vmatpush.xpose.msra.mxu0 0.0
        %619 = vmatpush.xpose.msra.mxu0 0.0
        %620 = vmatpush.xpose.msra.mxu0 0.0
        %621 = vmatpush.xpose.msra.mxu0 0.0
        %622 = vmatpush.xpose.msra.mxu0 0.0
        %623 = vmatpush.xpose.msra.mxu0 0.0
        %624 = vmatpush.xpose.msra.mxu0 0.0
        %625 = vmatpush.xpose.msra.mxu0 0.0
        %626 = vmatpush.xpose.msra.mxu0 0.0
        %627 = vmatpush.xpose.msra.mxu0 0.0
        %628 = vmatpush.xpose.msra.mxu0 0.0
        %629 = vmatpush.xpose.msra.mxu0 0.0
        %630 = vmatpush.xpose.msra.mxu0 0.0
        %631 = vmatpush.xpose.msra.mxu0 0.0
        %632 = vmatpush.xpose.msra.mxu0 0.0
        %633 = vmatpush.xpose.msra.mxu0 %v616
        %634 = vmatmul.f32.gmra.mxu0 %v613
        %v635 = vpop.f32.mrf.mxu0
        %v636 = vadd.f32 0.0, %v635
        %637 = vdwg.mxu0
        %v638 = vsel %vm611, %v636, -inf
        %639 = vmax.xlane.f32.xlu0 %v638
        %v640 = vpop.xlane.xlu0 %639
        %v641 = vsub.f32 %v636, %v640
        %v642 = vmul.f32 %v641, 1.442695
        %v643 = vpow.pop %v642
        %v644 = vsel %vm611, %v643, 0.0
        %645 = vadd.xlane.f32.xlu0 %v644
        %v646 = vpop.xlane.xlu0 %645
        %v647 = vrcp.pop %v646
        %v648 = vmul.f32 %v646, %v647
        %v649 = vsub.f32 1.0, %v648
        %v650 = vmul.f32 %v647, %v649
        %v651 = vadd.f32 %v647, %v650
        %vm652 = vweird.f32 %v646
        %vm653 = vweird.f32 %v647
        %vm654 = vmor %vm652, %vm653
        %v655 = vsel %vm654, %v647, %v651
        %v656 = vand.u32 2147483647, %v646
        %vm657 = vcmp.eq.f32.partialorder %v656, 8.507059e+37
        %v658 = vand.u32 %v646, 2147483648
        %v659 = vor.u32 1.1754944e-38, %v658
        %v660 = vsel %vm657, %v659, %v655
        %v661 = vmul.f32 %v643, %v660
        %662 = vst.msk [vmem:[%s474] sm:$0xff] %vm611, %v661
        %v664 = vsel %vm611, %v661, 0
        %666 = vmatpush.msra.mxu0 0.0
        %667 = vmatpush.msra.mxu0 0.0
        %668 = vmatpush.msra.mxu0 0.0
        %669 = vmatpush.msra.mxu0 0.0
        %670 = vmatpush.msra.mxu0 0.0
        %671 = vmatpush.msra.mxu0 0.0
        %672 = vmatpush.msra.mxu0 0.0
        %673 = vmatpush.msra.mxu0 0.0
        %674 = vmatpush.msra.mxu0 0.0
        %675 = vmatpush.msra.mxu0 0.0
        %676 = vmatpush.msra.mxu0 0.0
        %677 = vmatpush.msra.mxu0 0.0
        %678 = vmatpush.msra.mxu0 0.0
        %679 = vmatpush.msra.mxu0 0.0
        %680 = vmatpush.msra.mxu0 0.0
        %681 = vmatpush.msra.mxu0 %v610
        %682 = vmatmul.f32.gmra.mxu0 %v664
        %v683 = vpop.f32.mrf.mxu0
        %v684 = vadd.f32 0.0, %v683
        %685 = vdwg.mxu0
        %s686 = scalar_lea.vmem %s9, %s606
        %v687 = vld [vmem:[%s686] sm:$0xff]
        %v689 = vsel %vm611, %v684, 0
        %691 = vmatpush.msra.mxu0 0.0
        %692 = vmatpush.msra.mxu0 0.0
        %693 = vmatpush.msra.mxu0 0.0
        %694 = vmatpush.msra.mxu0 0.0
        %695 = vmatpush.msra.mxu0 0.0
        %696 = vmatpush.msra.mxu0 0.0
        %697 = vmatpush.msra.mxu0 0.0
        %698 = vmatpush.msra.mxu0 0.0
        %699 = vmatpush.msra.mxu0 0.0
        %700 = vmatpush.msra.mxu0 0.0
        %701 = vmatpush.msra.mxu0 0.0
        %702 = vmatpush.msra.mxu0 0.0
        %703 = vmatpush.msra.mxu0 0.0
        %704 = vmatpush.msra.mxu0 0.0
        %705 = vmatpush.msra.mxu0 0.0
        %706 = vmatpush.msra.mxu0 %v687
        %707 = vmatmul.f32.gmra.mxu0 %v689
        %v708 = vpop.f32.mrf.mxu0
        %v709 = vadd.f32 0.0, %v708
        %710 = vdwg.mxu0
        %p711 = scmp.eq.s32.totalorder %s37, 0
        // Predicated region
        $region69: #{tpu_custom_call.1} parent=63 // pred_check
          %p712 = pneg %p711
        $region70: #{tpu_custom_call.1} parent=63 // pred_check_branch
          %714 = sbr.rel (%p712) target = $region72
        $region71: #{tpu_custom_call.1} parent=63 // pred_region
          %v715 = vld [vmem:[%s10] sm:$0x1]
          %v717 = vperm.slane %v715, 0
          %v719 = vadd.f32 %v709, %v717
          %720 = vst.msk [vmem:[%s467] sm:$0xff] %vm582, %v719
        $region72: #{tpu_custom_call.1} parent=63 // pred_fallthru
          _
        %p721 = scmp.ne.s32.totalorder %s37, 0
        // Predicated region
        $region73: #{tpu_custom_call.1} parent=63 // pred_check
          %p722 = pneg %p721
        $region74: #{tpu_custom_call.1} parent=63 // pred_check_branch
          %724 = sbr.rel (%p722) target = $region76
        $region75: #{tpu_custom_call.1} parent=63 // pred_region
          %v725 = vld [vmem:[%s467] sm:$0xff]
          %v726 = vadd.f32 %v725, %v709
          %727 = vst.msk [vmem:[%s467] sm:$0xff] %vm582, %v726
        $region76: #{tpu_custom_call.1} parent=63 // pred_fallthru
          _
        %s728 = sand.u32 %s307, 1
        %s729 = scalar_lea.sflag [#allocation5], %s728
        %s730 = sand.u32 %s307, 1
        %s731 = smul.addr %s730, 8
        %s732 = scalar_lea.vmem [#allocation4], %s731
        %s733 = sand.u32 %s337, 1
        %s734 = scalar_lea.sflag [#allocation7], %s733
        %s735 = sand.u32 %s337, 1
        %s736 = smul.addr %s735, 8
        %s737 = scalar_lea.vmem [#allocation6], %s736
        // Predicated region
        $region77: #{tpu_custom_call.1} parent=63 // pred_check
          %p738 = pneg %p317
        $region78: #{tpu_custom_call.1} parent=63 // pred_check_branch
          %740 = sbr.rel (%p738) target = $region80
        $region79: #{tpu_custom_call.1} parent=63 // pred_region
          %742 = vsyncadd %s729, 0
          %s743 = sadd.s32 %s36, %s35
          %s744 = smul.addr %s743, 8
          %s745 = scalar_lea.hbm %s11, %s744
          %s747 = sshll.u32 %s732, 4
          %s748 = int_to_ptr.vmem [resolvable:$true] %s747
          %s749 = sshll.u32 %s745, 4
          %s750 = int_to_ptr.hbm [resolvable:$true] %s749
          %752 = dma.vmem_to_hbm [thread:$0]  %s748, 128, %s750, %s729
        $region80: #{tpu_custom_call.1} parent=63 // pred_fallthru
          _
        // Predicated region
        $region81: #{tpu_custom_call.1} parent=63 // pred_check
          %p753 = pneg %p347
        $region82: #{tpu_custom_call.1} parent=63 // pred_check_branch
          %755 = sbr.rel (%p753) target = $region84
        $region83: #{tpu_custom_call.1} parent=63 // pred_region
          %757 = vsyncadd %s734, 0
          %s758 = sadd.s32 %s36, %s37
          %s759 = smul.addr %s35, 4
          %s760 = sadd.s32 %s758, %s759
          %s761 = smul.addr %s760, 8
          %s762 = scalar_lea.hbm %s12, %s761
          %s764 = sshll.u32 %s737, 4
          %s765 = int_to_ptr.vmem [resolvable:$true] %s764
          %s766 = sshll.u32 %s762, 4
          %s767 = int_to_ptr.hbm [resolvable:$true] %s766
          %769 = dma.vmem_to_hbm [thread:$0]  %s765, 128, %s767, %s734
        $region84: #{tpu_custom_call.1} parent=63 // pred_fallthru
          _
      $region64: #{tpu_custom_call.1} parent=5 // pred_fallthru
        _
      %p770 = scmp.le.s32.totalorder 2, %s25
      // Predicated region
      $region85: #{tpu_custom_call.1} parent=5 // pred_check
        %p771 = pneg %p770
      $region86: #{tpu_custom_call.1} parent=5 // pred_check_branch
        %773 = sbr.rel (%p771) target = $region88
      $region87: #{tpu_custom_call.1} parent=5 // pred_region
        %s774 = ssub.s32 %s25, 2
        // Predicated region
        $region89: #{tpu_custom_call.1} parent=87 // pred_check
          %p775 = pneg %p323
        $region90: #{tpu_custom_call.1} parent=87 // pred_check_branch
          %777 = sbr.rel (%p775) target = $region92
        $region91: #{tpu_custom_call.1} parent=87 // pred_region
          %s778 = sand.u32 %s308, 1
          %s779 = scalar_lea.sflag [#allocation5], %s778
          %s780 = sand.u32 %s308, 1
          %s781 = smul.addr %s780, 8
          %s782 = scalar_lea.vmem [#allocation4], %s781
          %784 = dma.done %s779, 128
        $region92: #{tpu_custom_call.1} parent=87 // pred_fallthru
          _
        // Predicated region
        $region93: #{tpu_custom_call.1} parent=87 // pred_check
          %p785 = pneg %p353
        $region94: #{tpu_custom_call.1} parent=87 // pred_check_branch
          %787 = sbr.rel (%p785) target = $region96
        $region95: #{tpu_custom_call.1} parent=87 // pred_region
          %s788 = sand.u32 %s338, 1
          %s789 = scalar_lea.sflag [#allocation7], %s788
          %s790 = sand.u32 %s338, 1
          %s791 = smul.addr %s790, 8
          %s792 = scalar_lea.vmem [#allocation6], %s791
          %794 = dma.done %s789, 128
        $region96: #{tpu_custom_call.1} parent=87 // pred_fallthru
          _
      $region88: #{tpu_custom_call.1} parent=5 // pred_fallthru
        _
    $region6: #{tpu_custom_call.1} parent=1 // loop_footer
      %s29 = sadd.s32 1, %s25
    $region7: #{tpu_custom_call.1} parent=1 // loop_footer_branch
      %24 = sbr.rel target = $region3
    $region8: #{tpu_custom_call.1} parent=1 // loop_exit
      _
    %795 = vsyncpa [#allocation5], 1
    %s796 = scalar_lea.sflag [#allocation5], 1
    %797 = vsyncpa %s796, 1
    %798 = vsyncpa [#allocation7], 1
    %s799 = scalar_lea.sflag [#allocation7], 1
    %800 = vsyncpa %s799, 1

</llo_original>
